<compile_context>
chip_gen: v5e
topology: v5e:2x2
jax: 0.10.0
libtpu: 0.0.40
codegen_flags: <defaults>
</compile_context>

<pallas_src>
import functools

import jax
import jax.numpy as jnp
from jax import lax
from jax.experimental import pallas as pl
from jax.experimental.pallas import tpu as pltpu


_MXU_MIN_K = 32          # use the MXU for a 1x1 conv only if the contraction dim >= this
_TARGET_LANES = 4096     # lanes per grid step to aim for (amortizes ~0.35us/step overhead)


def _ceil_to(x, m):
    return ((x + m - 1) // m) * m


def _sublane_multiple(*dtypes):
    """Native sublane packing: 8 rows for 32-bit, 16 for 16-bit, 32 for 8-bit dtypes."""
    m = 8
    for dt in dtypes:
        m = max(m, 32 // jnp.dtype(dt).itemsize)
    return m


def _tpu_generation():
    """Best-effort chip detection: VMEM budget, parallel TensorCores, bf16-VPU support."""
    kind = ""
    try:
        dev = jax.devices()[0]
        if getattr(dev, "platform", "") == "tpu":
            kind = (getattr(dev, "device_kind", "") or "").lower()
    except Exception:
        pass
    if "v7" in kind:
        gen = dict(vmem_bytes=64 * 2**20, parallel_cores=2, bf16_vpu=True)
    elif "v6" in kind:
        gen = dict(vmem_bytes=128 * 2**20, parallel_cores=1, bf16_vpu=True)
    elif "v5p" in kind or "v4" in kind:
        gen = dict(vmem_bytes=128 * 2**20, parallel_cores=2, bf16_vpu=False)
    elif "v5" in kind:   # v5e / "v5 lite"
        gen = dict(vmem_bytes=128 * 2**20, parallel_cores=1, bf16_vpu=False)
    else:                # unknown: be conservative
        gen = dict(vmem_bytes=64 * 2**20, parallel_cores=1, bf16_vpu=False)
    try:  # refine VMEM capacity when the query is available on this build
        cap = int(getattr(pltpu.get_tpu_info(), "vmem_capacity_bytes", 0) or 0)
        if cap > 0:
            gen["vmem_bytes"] = cap
    except Exception:
        pass
    return gen


def _plan_slabs(n, seg_len, *, per_lane_bytes, fixed_bytes, vmem_limit_bytes, parallel_cores):
    """Pick (batch-per-slab, grid size): few, lane-dense grid steps bounded by VMEM, while
    keeping at least one grid step per TensorCore on multi-core chips."""
    budget = int(max(vmem_limit_bytes - fixed_bytes, 1 << 20) * 0.6)  # headroom: scratch/regalloc
    lane_cap = max(128, budget // max(per_lane_bytes, 1))
    lanes = min(max(_TARGET_LANES, 128), lane_cap)
    b_blk = max(1, min(n, lanes // seg_len))
    if parallel_cores > 1 and n >= parallel_cores:
        b_blk = min(b_blk, -(-n // parallel_cores))     # keep >= parallel_cores grid steps
    g = -(-n // b_blk)
    return b_blk, g


def _fold_bn(gamma, beta, mean, var, eps=1e-5):
    scale = gamma / jnp.sqrt(var + eps)
    bias = beta - mean * scale
    return scale.astype(jnp.float32), bias.astype(jnp.float32)


def _vpu_pointwise(w, x, k):
    """(M, Kp) @ (Kp, L) -> (M, L): unrolled VPU broadcast-MACs over the k real channels.
    Avoids the MXU's fixed push/pop latency when the contraction dim is tiny."""
    acc = w[:, 0:1] * x[0:1, :]
    for i in range(1, k):
        acc = acc + w[:, i:i + 1] * x[i:i + 1, :]
    return acc


def _inverted_residual_kernel(x_ref, w1_ref, b1_ref, wdw_ref, b2_ref, w3_ref, b3_ref,
                              mask_ref, o_ref, *, use_res, mxu_conv1, mxu_conv3,
                              ew_dtype, c_in, hidden):
    x = x_ref[0]                                                        # (Cp, Lp)

    # --- 1) expand: 1x1 conv (BN scale pre-folded) + bias + ReLU6, f32 accumulation ---
    if mxu_conv1:
        h = jnp.dot(w1_ref[...], x, preferred_element_type=jnp.float32)
    else:
        h = _vpu_pointwise(w1_ref[...], x.astype(jnp.float32), c_in)
    h = jnp.clip(h + b1_ref[...], 0.0, 6.0)

    # Zero spacer / padding lanes (they hold clip(b1,0,6)) and drop to the elementwise
    # dtype (bf16 on v6e/v7x halves the dominant VALU/XLU work) in a single multiply.
    h = h.astype(ew_dtype) * mask_ref[...]

    # --- 2) depthwise k=3, pad=1, stride=1 (BN pre-folded) + bias + ReLU6 ---
    lp = h.shape[1]
    w_dw = wdw_ref[...]                                                 # (Hp, 3)
    d = (w_dw[:, 0:1] * pltpu.roll(h, shift=1, axis=1)                  # h[t-1]
         + w_dw[:, 1:2] * h
         + w_dw[:, 2:3] * pltpu.roll(h, shift=lp - 1, axis=1))          # h[t+1]
    d = jnp.clip(d + b2_ref[...], 0.0, 6.0)

    # --- 3) project: 1x1 conv (BN pre-folded) + bias, no activation ---
    if mxu_conv3:
        y = jnp.dot(w3_ref[...], d.astype(w3_ref.dtype), preferred_element_type=jnp.float32)
    else:
        y = _vpu_pointwise(w3_ref[...], d.astype(jnp.float32), hidden)
    y = y + b3_ref[...]

    # --- 4) residual (if x was DMA'd as bf16 for the MXU path, the residual uses the
    #         bf16-rounded activations; pass mxu_dtype=float32 for tighter accuracy) ---
    if use_res:
        y = y + x.astype(jnp.float32)

    o_ref[0] = y.astype(o_ref.dtype)


def inverted_residual_1d(x, params, *, stride=1, mxu_dtype=None, ew_dtype=None, out_dtype=None):
    """Fused InvertedResidual1d forward.  x: (N, C_in, L) float.  params: conv + BN stats.

    mxu_dtype: dtype of MXU matmul operands (default bf16 on every TPU generation).
    ew_dtype:  dtype of the depthwise/elementwise stage (default bf16 on v6e/v7x, f32 on v5e).
    out_dtype: output dtype (default x.dtype; use bf16 when stacking blocks).
    """
    if stride != 1:
        # TODO(synk): stride=2 depthwise downsampling is not implemented in the Pallas kernel.
        raise NotImplementedError("only stride=1 is implemented in the Pallas kernel")

    gen = _tpu_generation()
    if mxu_dtype is None:
        mxu_dtype = jnp.bfloat16     # MXU is natively bf16 on v5e/v6e/v7x; f32 is multi-pass
    if ew_dtype is None:
        ew_dtype = jnp.bfloat16 if gen["bf16_vpu"] else jnp.float32
    if out_dtype is None:
        out_dtype = x.dtype

    N, C_in, L = x.shape
    H = params["w1"].shape[0]
    oup = params["w3"].shape[0]
    use_res = (stride == 1) and (C_in == oup)

    mxu_conv1 = C_in >= _MXU_MIN_K
    mxu_conv3 = H >= _MXU_MIN_K
    x_kern_dtype = mxu_dtype if mxu_conv1 else jnp.float32   # VPU path stays f32 (v5e-safe)
    w1_dtype = mxu_dtype if mxu_conv1 else jnp.float32
    w3_dtype = mxu_dtype if mxu_conv3 else jnp.float32

    # ---- fold inference-mode BN scale into the conv weights; keep per-channel biases ----
    s1, b1 = _fold_bn(params["g1"], params["be1"], params["m1"], params["v1"])
    s2, b2 = _fold_bn(params["g2"], params["be2"], params["m2"], params["v2"])
    s3, b3 = _fold_bn(params["g3"], params["be3"], params["m3"], params["v3"])
    w1f = params["w1"].astype(jnp.float32) * s1[:, None]
    wdwf = params["wdw"].astype(jnp.float32) * s2[:, None]
    w3f = params["w3"].astype(jnp.float32) * s3[:, None]

    # ---- channel padding to the native sublane packing of the dtypes in play ----
    sub = _sublane_multiple(mxu_dtype, ew_dtype, x_kern_dtype)
    Cp, Hp, Op = _ceil_to(C_in, sub), _ceil_to(H, sub), _ceil_to(oup, sub)
    w1p = jnp.zeros((Hp, Cp), jnp.float32).at[:H, :C_in].set(w1f).astype(w1_dtype)
    w3p = jnp.zeros((Op, Hp), jnp.float32).at[:oup, :H].set(w3f).astype(w3_dtype)
    wdwp = jnp.zeros((Hp, 3), jnp.float32).at[:H, :].set(wdwf).astype(ew_dtype)
    b1p = jnp.zeros((Hp, 1), jnp.float32).at[:H, 0].set(b1)
    b2p = jnp.zeros((Hp, 1), jnp.float32).at[:H, 0].set(b2).astype(ew_dtype)
    b3p = jnp.zeros((Op, 1), jnp.float32).at[:oup, 0].set(b3)

    # ---- generation-aware slab sizing + explicit VMEM limit ----
    vmem_limit = int(gen["vmem_bytes"] * 0.8)
    xb, eb, ob = (jnp.dtype(t).itemsize for t in (x_kern_dtype, ew_dtype, out_dtype))
    per_lane = int(1.25 * (2 * Cp * xb       # double-buffered input slab
                           + 2 * Op * ob     # double-buffered output slab
                           + Hp * 4          # f32 h before the elementwise-dtype cast
                           + 4 * Hp * eb     # h, two rolled neighbours, d
                           + 2 * Op * 4      # f32 y (+ slack)
                           + eb))            # validity mask
    fixed = 2 * int(w1p.size * w1p.dtype.itemsize + w3p.size * w3p.dtype.itemsize
                    + wdwp.size * wdwp.dtype.itemsize
                    + (b1p.size + b3p.size) * 4 + b2p.size * b2p.dtype.itemsize)
    seg = L + 1                               # +1 zero spacer lane between batch segments
    b_blk, G = _plan_slabs(N, seg, per_lane_bytes=per_lane, fixed_bytes=fixed,
                           vmem_limit_bytes=vmem_limit,
                           parallel_cores=gen["parallel_cores"])
    N_pad = G * b_blk
    LB = b_blk * seg
    Lp = _ceil_to(LB, 128)

    # ---- fold batch into the lane axis (zero spacer between segments, pad to 128 lanes) ----
    xp = jnp.pad(x.astype(jnp.float32), ((0, N_pad - N), (0, Cp - C_in), (0, 1)))
    xp = xp.reshape(G, b_blk, Cp, seg).transpose(0, 2, 1, 3).reshape(G, Cp, LB)
    xp = jnp.pad(xp, ((0, 0), (0, 0), (0, Lp - LB))).astype(x_kern_dtype)

    # Single validity mask: zero on spacer lanes / batch padding / lane padding.
    pos = jnp.arange(Lp, dtype=jnp.int32)
    mask = (((pos % seg) < L) & (pos < LB)).astype(ew_dtype)[None, :]    # (1, Lp)

    kernel_fn = functools.partial(
        _inverted_residual_kernel, use_res=use_res, mxu_conv1=mxu_conv1,
        mxu_conv3=mxu_conv3, ew_dtype=ew_dtype, c_in=C_in, hidden=H)

    def _call(single_buffer_params):
        def const_spec(shape):
            rank = len(shape)

            def idx(g):
                return (0,) * rank

            if single_buffer_params:
                return pl.BlockSpec(shape, idx, pipeline_mode=pl.Buffered(1))
            return pl.BlockSpec(shape, idx)

        return pl.pallas_call(
            kernel_fn,
            out_shape=jax.ShapeDtypeStruct((G, Op, Lp), out_dtype),
            grid_spec=pltpu.PrefetchScalarGridSpec(
                num_scalar_prefetch=0,
                grid=(G,),
                in_specs=[
                    pl.BlockSpec((1, Cp, Lp), lambda g: (g, 0, 0)),
                    const_spec((Hp, Cp)), const_spec((Hp, 1)),
                    const_spec((Hp, 3)), const_spec((Hp, 1)),
                    const_spec((Op, Hp)), const_spec((Op, 1)),
                    const_spec((1, Lp)),
                ],
                out_specs=pl.BlockSpec((1, Op, Lp), lambda g: (g, 0, 0)),
            ),
            compiler_params=pltpu.CompilerParams(
                dimension_semantics=("parallel",),
                vmem_limit_bytes=vmem_limit,
            ),
        )(xp, w1p, b1p, wdwp, b2p, w3p, b3p, mask)

    try:
        # Grid-invariant parameter blocks single-buffered -> more VMEM left for the slab.
        out_p = _call(True)
    except Exception:
        # pipeline_mode=pl.Buffered(1) unsupported on this JAX build: default double-buffering.
        out_p = _call(False)

    # ---- undo lane folding / padding ----
    out = out_p[:, :, :LB].reshape(G, Op, b_blk, seg)[..., :L]
    out = out.transpose(0, 2, 1, 3).reshape(N_pad, Op, L)
    return out[:N, :oup, :]


def _reference_forward(x, params, *, stride=1):
    """Pure-JAX reference mirroring the PyTorch module (inference-mode BatchNorm)."""
    prec = lax.Precision.HIGHEST

    def bn(h, g, be, m, v, eps=1e-5):
        return (h - m[None, :, None]) / jnp.sqrt(v[None, :, None] + eps) \
            * g[None, :, None] + be[None, :, None]

    H = params["w1"].shape[0]
    h = jnp.einsum("oi,nil->nol", params["w1"], x, precision=prec)
    h = jnp.clip(bn(h, params["g1"], params["be1"], params["m1"], params["v1"]), 0.0, 6.0)
    d = lax.conv_general_dilated(
        h, params["wdw"][:, None, :], window_strides=(stride,), padding=((1, 1),),
        feature_group_count=H, dimension_numbers=("NCH", "OIH", "NCH"), precision=prec)
    d = jnp.clip(bn(d, params["g2"], params["be2"], params["m2"], params["v2"]), 0.0, 6.0)
    y = jnp.einsum("oi,nil->nol", params["w3"], d, precision=prec)
    y = bn(y, params["g3"], params["be3"], params["m3"], params["v3"])
    if stride == 1 and x.shape[1] == y.shape[1]:
        y = y + x
    return y


def _init_params(key, inp, oup, expand_ratio):
    hidden = int(round(inp * expand_ratio))
    ks = jax.random.split(key, 12)
    return {
        "w1": jax.random.normal(ks[0], (hidden, inp), jnp.float32) * 0.3,
        "g1": 1.0 + 0.1 * jax.random.normal(ks[1], (hidden,), jnp.float32),
        "be1": 0.1 * jax.random.normal(ks[2], (hidden,), jnp.float32),
        "m1": 0.05 * jax.random.normal(ks[3], (hidden,), jnp.float32),
        "v1": 1.0 + 0.1 * jax.random.uniform(ks[3], (hidden,), jnp.float32),
        "wdw": jax.random.normal(ks[4], (hidden, 3), jnp.float32) * 0.3,
        "g2": 1.0 + 0.1 * jax.random.normal(ks[5], (hidden,), jnp.float32),
        "be2": 0.1 * jax.random.normal(ks[6], (hidden,), jnp.float32),
        "m2": 0.05 * jax.random.normal(ks[7], (hidden,), jnp.float32),
        "v2": 1.0 + 0.1 * jax.random.uniform(ks[7], (hidden,), jnp.float32),
        "w3": jax.random.normal(ks[8], (oup, hidden), jnp.float32) * 0.3,
        "g3": 1.0 + 0.1 * jax.random.normal(ks[9], (oup,), jnp.float32),
        "be3": 0.1 * jax.random.normal(ks[10], (oup,), jnp.float32),
        "m3": 0.05 * jax.random.normal(ks[11], (oup,), jnp.float32),
        "v3": 1.0 + 0.1 * jax.random.uniform(ks[11], (oup,), jnp.float32),
    }


if __name__ == "__main__":
    key = jax.random.PRNGKey(0)
    k1, k2, k3, k4 = jax.random.split(key, 4)

    # --- Config 1: small, InvertedResidual1d(inp=4, oup=4, stride=1, expand_ratio=2). ---
    # Channel counts are tiny -> both 1x1 convs take the unrolled VPU broadcast-MAC path.
    N, INP, OUP, L, EXPAND = 2, 4, 4, 16, 2
    x = jax.random.normal(k1, (N, INP, L), jnp.float32)
    params = _init_params(k2, INP, OUP, EXPAND)
    ref = _reference_forward(x, params, stride=1)

    # Exact-semantics run: f32 everywhere, tight tolerance vs the JAX reference.
    out_f32 = jax.block_until_ready(
        inverted_residual_1d(x, params, stride=1,
                             mxu_dtype=jnp.float32, ew_dtype=jnp.float32))
    if out_f32.shape != ref.shape or not jnp.allclose(out_f32, ref, atol=5e-4, rtol=5e-4):
        raise AssertionError("Pallas kernel (f32) output mismatch vs JAX reference")

    # Generation-default run: bf16 MXU operands everywhere, bf16 elementwise on v6e/v7x.
    out_auto = jax.block_until_ready(inverted_residual_1d(x, params, stride=1))
    if not jnp.allclose(out_auto, ref, atol=2e-1, rtol=1e-1):
        raise AssertionError("Pallas kernel (auto dtypes) output mismatch vs JAX reference")

    # --- Config 2: larger channels to exercise the MXU path + residual (inp == oup). ---
    N2, INP2, OUP2, L2, EXPAND2 = 4, 64, 64, 64, 4
    x2 = jax.random.normal(k3, (N2, INP2, L2), jnp.float32)
    params2 = _init_params(k4, INP2, OUP2, EXPAND2)
    ref2 = _reference_forward(x2, params2, stride=1)
    out2 = jax.block_until_ready(inverted_residual_1d(x2, params2, stride=1))
    if not jnp.allclose(out2, ref2, atol=5e-1, rtol=1e-1):
        raise AssertionError("Pallas kernel (MXU path) output mismatch vs JAX reference")

    print("KERNEL_OK")
</pallas_src>

<mosaic_0001>
module attributes {stable_mosaic.version = 11 : i64} {
  func.func @_inverted_residual_kernel(%arg0: i32, %arg1: memref<1x8x128xf32, #tpu.memory_space<vmem>>, %arg2: memref<8x8xf32, #tpu.memory_space<vmem>>, %arg3: memref<8x1xf32, #tpu.memory_space<vmem>>, %arg4: memref<8x3xf32, #tpu.memory_space<vmem>>, %arg5: memref<8x1xf32, #tpu.memory_space<vmem>>, %arg6: memref<8x8xf32, #tpu.memory_space<vmem>>, %arg7: memref<8x1xf32, #tpu.memory_space<vmem>>, %arg8: memref<1x128xf32, #tpu.memory_space<vmem>>, %arg9: memref<1x8x128xf32, #tpu.memory_space<vmem>>) attributes {dimension_semantics = [#tpu.dimension_semantics<parallel>], iteration_bounds = array<i64: 1>, scalar_prefetch = 0 : i64, scratch_operands = 0 : i64, tpu.core_type = #tpu.core_type<tc>, window_params = [{transform_indices = @transform_0, window_bounds = array<i64: 1, 8, 128>}, {pipeline_mode = #tpu.pipeline_mode<synchronous>, transform_indices = @transform_1, window_bounds = array<i64: 8, 8>}, {pipeline_mode = #tpu.pipeline_mode<synchronous>, transform_indices = @transform_2, window_bounds = array<i64: 8, 1>}, {pipeline_mode = #tpu.pipeline_mode<synchronous>, transform_indices = @transform_3, window_bounds = array<i64: 8, 3>}, {pipeline_mode = #tpu.pipeline_mode<synchronous>, transform_indices = @transform_4, window_bounds = array<i64: 8, 1>}, {pipeline_mode = #tpu.pipeline_mode<synchronous>, transform_indices = @transform_5, window_bounds = array<i64: 8, 8>}, {pipeline_mode = #tpu.pipeline_mode<synchronous>, transform_indices = @transform_6, window_bounds = array<i64: 8, 1>}, {pipeline_mode = #tpu.pipeline_mode<synchronous>, transform_indices = @transform_7, window_bounds = array<i64: 1, 128>}, {transform_indices = @transform_8, window_bounds = array<i64: 1, 8, 128>}]} {
    %c0 = arith.constant 0 : index
    %c0_0 = arith.constant 0 : index
    %c0_1 = arith.constant 0 : index
    %0 = vector.load %arg1[%c0, %c0_0, %c0_1] : memref<1x8x128xf32, #tpu.memory_space<vmem>>, vector<1x8x128xf32>
    %1 = vector.shape_cast %0 : vector<1x8x128xf32> to vector<8x128xf32>
    %c0_2 = arith.constant 0 : index
    %c0_3 = arith.constant 0 : index
    %2 = vector.load %arg2[%c0_2, %c0_3] : memref<8x8xf32, #tpu.memory_space<vmem>>, vector<8x8xf32>
    %3 = vector.extract_strided_slice %2 {offsets = [0, 0], sizes = [8, 1], strides = [1, 1]} : vector<8x8xf32> to vector<8x1xf32>
    %4 = vector.extract_strided_slice %1 {offsets = [0, 0], sizes = [1, 128], strides = [1, 1]} : vector<8x128xf32> to vector<1x128xf32>
    %5 = vector.broadcast %3 : vector<8x1xf32> to vector<8x128xf32>
    %6 = vector.broadcast %4 : vector<1x128xf32> to vector<8x128xf32>
    %7 = arith.mulf %5, %6 : vector<8x128xf32>
    %8 = vector.extract_strided_slice %2 {offsets = [0, 1], sizes = [8, 1], strides = [1, 1]} : vector<8x8xf32> to vector<8x1xf32>
    %9 = vector.extract_strided_slice %1 {offsets = [1, 0], sizes = [1, 128], strides = [1, 1]} : vector<8x128xf32> to vector<1x128xf32>
    %10 = vector.broadcast %8 : vector<8x1xf32> to vector<8x128xf32>
    %11 = vector.broadcast %9 : vector<1x128xf32> to vector<8x128xf32>
    %12 = arith.mulf %10, %11 : vector<8x128xf32>
    %13 = arith.addf %7, %12 : vector<8x128xf32>
    %14 = vector.extract_strided_slice %2 {offsets = [0, 2], sizes = [8, 1], strides = [1, 1]} : vector<8x8xf32> to vector<8x1xf32>
    %15 = vector.extract_strided_slice %1 {offsets = [2, 0], sizes = [1, 128], strides = [1, 1]} : vector<8x128xf32> to vector<1x128xf32>
    %16 = vector.broadcast %14 : vector<8x1xf32> to vector<8x128xf32>
    %17 = vector.broadcast %15 : vector<1x128xf32> to vector<8x128xf32>
    %18 = arith.mulf %16, %17 : vector<8x128xf32>
    %19 = arith.addf %13, %18 : vector<8x128xf32>
    %20 = vector.extract_strided_slice %2 {offsets = [0, 3], sizes = [8, 1], strides = [1, 1]} : vector<8x8xf32> to vector<8x1xf32>
    %21 = vector.extract_strided_slice %1 {offsets = [3, 0], sizes = [1, 128], strides = [1, 1]} : vector<8x128xf32> to vector<1x128xf32>
    %22 = vector.broadcast %20 : vector<8x1xf32> to vector<8x128xf32>
    %23 = vector.broadcast %21 : vector<1x128xf32> to vector<8x128xf32>
    %24 = arith.mulf %22, %23 : vector<8x128xf32>
    %25 = arith.addf %19, %24 : vector<8x128xf32>
    %c0_4 = arith.constant 0 : index
    %c0_5 = arith.constant 0 : index
    %26 = vector.load %arg3[%c0_4, %c0_5] : memref<8x1xf32, #tpu.memory_space<vmem>>, vector<8x1xf32>
    %27 = vector.broadcast %26 : vector<8x1xf32> to vector<8x128xf32>
    %28 = arith.addf %25, %27 : vector<8x128xf32>
    %cst = arith.constant 0.000000e+00 : f32
    %cst_6 = arith.constant 6.000000e+00 : f32
    %29 = vector.broadcast %cst : f32 to vector<8x128xf32>
    %30 = arith.maximumf %29, %28 : vector<8x128xf32>
    %31 = vector.broadcast %cst_6 : f32 to vector<8x128xf32>
    %32 = arith.minimumf %31, %30 : vector<8x128xf32>
    %c0_7 = arith.constant 0 : index
    %c0_8 = arith.constant 0 : index
    %33 = vector.load %arg8[%c0_7, %c0_8] : memref<1x128xf32, #tpu.memory_space<vmem>>, vector<1x128xf32>
    %34 = vector.broadcast %33 : vector<1x128xf32> to vector<8x128xf32>
    %35 = arith.mulf %32, %34 : vector<8x128xf32>
    %c0_9 = arith.constant 0 : index
    %c0_10 = arith.constant 0 : index
    %36 = vector.load %arg4[%c0_9, %c0_10] : memref<8x3xf32, #tpu.memory_space<vmem>>, vector<8x3xf32>
    %37 = vector.extract_strided_slice %36 {offsets = [0, 0], sizes = [8, 1], strides = [1, 1]} : vector<8x3xf32> to vector<8x1xf32>
    %c1_i32 = arith.constant 1 : i32
    %38 = tpu.dynamic_rotate %35 by %c1_i32 dim 1 : vector<8x128xf32>, i32 -> vector<8x128xf32>
    %39 = vector.broadcast %37 : vector<8x1xf32> to vector<8x128xf32>
    %40 = arith.mulf %39, %38 : vector<8x128xf32>
    %41 = vector.extract_strided_slice %36 {offsets = [0, 1], sizes = [8, 1], strides = [1, 1]} : vector<8x3xf32> to vector<8x1xf32>
    %42 = vector.broadcast %41 : vector<8x1xf32> to vector<8x128xf32>
    %43 = arith.mulf %42, %35 : vector<8x128xf32>
    %44 = arith.addf %40, %43 : vector<8x128xf32>
    %45 = vector.extract_strided_slice %36 {offsets = [0, 2], sizes = [8, 1], strides = [1, 1]} : vector<8x3xf32> to vector<8x1xf32>
    %c127_i32 = arith.constant 127 : i32
    %46 = tpu.dynamic_rotate %35 by %c127_i32 dim 1 : vector<8x128xf32>, i32 -> vector<8x128xf32>
    %47 = vector.broadcast %45 : vector<8x1xf32> to vector<8x128xf32>
    %48 = arith.mulf %47, %46 : vector<8x128xf32>
    %49 = arith.addf %44, %48 : vector<8x128xf32>
    %c0_11 = arith.constant 0 : index
    %c0_12 = arith.constant 0 : index
    %50 = vector.load %arg5[%c0_11, %c0_12] : memref<8x1xf32, #tpu.memory_space<vmem>>, vector<8x1xf32>
    %51 = vector.broadcast %50 : vector<8x1xf32> to vector<8x128xf32>
    %52 = arith.addf %49, %51 : vector<8x128xf32>
    %cst_13 = arith.constant 0.000000e+00 : f32
    %cst_14 = arith.constant 6.000000e+00 : f32
    %53 = vector.broadcast %cst_13 : f32 to vector<8x128xf32>
    %54 = arith.maximumf %53, %52 : vector<8x128xf32>
    %55 = vector.broadcast %cst_14 : f32 to vector<8x128xf32>
    %56 = arith.minimumf %55, %54 : vector<8x128xf32>
    %c0_15 = arith.constant 0 : index
    %c0_16 = arith.constant 0 : index
    %57 = vector.load %arg6[%c0_15, %c0_16] : memref<8x8xf32, #tpu.memory_space<vmem>>, vector<8x8xf32>
    %58 = vector.extract_strided_slice %57 {offsets = [0, 0], sizes = [8, 1], strides = [1, 1]} : vector<8x8xf32> to vector<8x1xf32>
    %59 = vector.extract_strided_slice %56 {offsets = [0, 0], sizes = [1, 128], strides = [1, 1]} : vector<8x128xf32> to vector<1x128xf32>
    %60 = vector.broadcast %58 : vector<8x1xf32> to vector<8x128xf32>
    %61 = vector.broadcast %59 : vector<1x128xf32> to vector<8x128xf32>
    %62 = arith.mulf %60, %61 : vector<8x128xf32>
    %63 = vector.extract_strided_slice %57 {offsets = [0, 1], sizes = [8, 1], strides = [1, 1]} : vector<8x8xf32> to vector<8x1xf32>
    %64 = vector.extract_strided_slice %56 {offsets = [1, 0], sizes = [1, 128], strides = [1, 1]} : vector<8x128xf32> to vector<1x128xf32>
    %65 = vector.broadcast %63 : vector<8x1xf32> to vector<8x128xf32>
    %66 = vector.broadcast %64 : vector<1x128xf32> to vector<8x128xf32>
    %67 = arith.mulf %65, %66 : vector<8x128xf32>
    %68 = arith.addf %62, %67 : vector<8x128xf32>
    %69 = vector.extract_strided_slice %57 {offsets = [0, 2], sizes = [8, 1], strides = [1, 1]} : vector<8x8xf32> to vector<8x1xf32>
    %70 = vector.extract_strided_slice %56 {offsets = [2, 0], sizes = [1, 128], strides = [1, 1]} : vector<8x128xf32> to vector<1x128xf32>
    %71 = vector.broadcast %69 : vector<8x1xf32> to vector<8x128xf32>
    %72 = vector.broadcast %70 : vector<1x128xf32> to vector<8x128xf32>
    %73 = arith.mulf %71, %72 : vector<8x128xf32>
    %74 = arith.addf %68, %73 : vector<8x128xf32>
    %75 = vector.extract_strided_slice %57 {offsets = [0, 3], sizes = [8, 1], strides = [1, 1]} : vector<8x8xf32> to vector<8x1xf32>
    %76 = vector.extract_strided_slice %56 {offsets = [3, 0], sizes = [1, 128], strides = [1, 1]} : vector<8x128xf32> to vector<1x128xf32>
    %77 = vector.broadcast %75 : vector<8x1xf32> to vector<8x128xf32>
    %78 = vector.broadcast %76 : vector<1x128xf32> to vector<8x128xf32>
    %79 = arith.mulf %77, %78 : vector<8x128xf32>
    %80 = arith.addf %74, %79 : vector<8x128xf32>
    %81 = vector.extract_strided_slice %57 {offsets = [0, 4], sizes = [8, 1], strides = [1, 1]} : vector<8x8xf32> to vector<8x1xf32>
    %82 = vector.extract_strided_slice %56 {offsets = [4, 0], sizes = [1, 128], strides = [1, 1]} : vector<8x128xf32> to vector<1x128xf32>
    %83 = vector.broadcast %81 : vector<8x1xf32> to vector<8x128xf32>
    %84 = vector.broadcast %82 : vector<1x128xf32> to vector<8x128xf32>
    %85 = arith.mulf %83, %84 : vector<8x128xf32>
    %86 = arith.addf %80, %85 : vector<8x128xf32>
    %87 = vector.extract_strided_slice %57 {offsets = [0, 5], sizes = [8, 1], strides = [1, 1]} : vector<8x8xf32> to vector<8x1xf32>
    %88 = vector.extract_strided_slice %56 {offsets = [5, 0], sizes = [1, 128], strides = [1, 1]} : vector<8x128xf32> to vector<1x128xf32>
    %89 = vector.broadcast %87 : vector<8x1xf32> to vector<8x128xf32>
    %90 = vector.broadcast %88 : vector<1x128xf32> to vector<8x128xf32>
    %91 = arith.mulf %89, %90 : vector<8x128xf32>
    %92 = arith.addf %86, %91 : vector<8x128xf32>
    %93 = vector.extract_strided_slice %57 {offsets = [0, 6], sizes = [8, 1], strides = [1, 1]} : vector<8x8xf32> to vector<8x1xf32>
    %94 = vector.extract_strided_slice %56 {offsets = [6, 0], sizes = [1, 128], strides = [1, 1]} : vector<8x128xf32> to vector<1x128xf32>
    %95 = vector.broadcast %93 : vector<8x1xf32> to vector<8x128xf32>
    %96 = vector.broadcast %94 : vector<1x128xf32> to vector<8x128xf32>
    %97 = arith.mulf %95, %96 : vector<8x128xf32>
    %98 = arith.addf %92, %97 : vector<8x128xf32>
    %99 = vector.extract_strided_slice %57 {offsets = [0, 7], sizes = [8, 1], strides = [1, 1]} : vector<8x8xf32> to vector<8x1xf32>
    %100 = vector.extract_strided_slice %56 {offsets = [7, 0], sizes = [1, 128], strides = [1, 1]} : vector<8x128xf32> to vector<1x128xf32>
    %101 = vector.broadcast %99 : vector<8x1xf32> to vector<8x128xf32>
    %102 = vector.broadcast %100 : vector<1x128xf32> to vector<8x128xf32>
    %103 = arith.mulf %101, %102 : vector<8x128xf32>
    %104 = arith.addf %98, %103 : vector<8x128xf32>
    %c0_17 = arith.constant 0 : index
    %c0_18 = arith.constant 0 : index
    %105 = vector.load %arg7[%c0_17, %c0_18] : memref<8x1xf32, #tpu.memory_space<vmem>>, vector<8x1xf32>
    %106 = vector.broadcast %105 : vector<8x1xf32> to vector<8x128xf32>
    %107 = arith.addf %104, %106 : vector<8x128xf32>
    %108 = arith.addf %107, %1 : vector<8x128xf32>
    %c0_19 = arith.constant 0 : index
    %c0_20 = arith.constant 0 : index
    %c0_21 = arith.constant 0 : index
    %109 = vector.load %arg9[%c0_19, %c0_20, %c0_21] : memref<1x8x128xf32, #tpu.memory_space<vmem>>, vector<1x8x128xf32>
    %110 = vector.shape_cast %109 : vector<1x8x128xf32> to vector<8x128xf32>
    %111 = vector.shape_cast %108 : vector<8x128xf32> to vector<1x8x128xf32>
    tpu.vector_store %arg9[%c0_19, %c0_20, %c0_21], %111 {strides = array<i32>} : memref<1x8x128xf32, #tpu.memory_space<vmem>>, vector<1x8x128xf32>,
    return
  }
  func.func @transform_0(%arg0: i32) -> (i32, i32, i32) {
    %c0_i32 = arith.constant 0 : i32
    %c0_i32_0 = arith.constant 0 : i32
    %c0_i32_1 = arith.constant 0 : i32
    return %arg0, %c0_i32, %c0_i32_0 : i32, i32, i32
  }
  func.func @transform_1(%arg0: i32) -> (i32, i32) {
    %c0_i32 = arith.constant 0 : i32
    %c0_i32_0 = arith.constant 0 : i32
    %c0_i32_1 = arith.constant 0 : i32
    return %c0_i32, %c0_i32_0 : i32, i32
  }
  func.func @transform_2(%arg0: i32) -> (i32, i32) {
    %c0_i32 = arith.constant 0 : i32
    %c0_i32_0 = arith.constant 0 : i32
    %c0_i32_1 = arith.constant 0 : i32
    return %c0_i32, %c0_i32_0 : i32, i32
  }
  func.func @transform_3(%arg0: i32) -> (i32, i32) {
    %c0_i32 = arith.constant 0 : i32
    %c0_i32_0 = arith.constant 0 : i32
    %c0_i32_1 = arith.constant 0 : i32
    return %c0_i32, %c0_i32_0 : i32, i32
  }
  func.func @transform_4(%arg0: i32) -> (i32, i32) {
    %c0_i32 = arith.constant 0 : i32
    %c0_i32_0 = arith.constant 0 : i32
    %c0_i32_1 = arith.constant 0 : i32
    return %c0_i32, %c0_i32_0 : i32, i32
  }
  func.func @transform_5(%arg0: i32) -> (i32, i32) {
    %c0_i32 = arith.constant 0 : i32
    %c0_i32_0 = arith.constant 0 : i32
    %c0_i32_1 = arith.constant 0 : i32
    return %c0_i32, %c0_i32_0 : i32, i32
  }
  func.func @transform_6(%arg0: i32) -> (i32, i32) {
    %c0_i32 = arith.constant 0 : i32
    %c0_i32_0 = arith.constant 0 : i32
    %c0_i32_1 = arith.constant 0 : i32
    return %c0_i32, %c0_i32_0 : i32, i32
  }
  func.func @transform_7(%arg0: i32) -> (i32, i32) {
    %c0_i32 = arith.constant 0 : i32
    %c0_i32_0 = arith.constant 0 : i32
    %c0_i32_1 = arith.constant 0 : i32
    return %c0_i32, %c0_i32_0 : i32, i32
  }
  func.func @transform_8(%arg0: i32) -> (i32, i32, i32) {
    %c0_i32 = arith.constant 0 : i32
    %c0_i32_0 = arith.constant 0 : i32
    %c0_i32_1 = arith.constant 0 : i32
    return %arg0, %c0_i32, %c0_i32_0 : i32, i32, i32
  }
}

module attributes {stable_mosaic.version = 11 : i64} {
  func.func @_inverted_residual_kernel(%arg0: i32, %arg1: memref<1x8x128xf32, #tpu.memory_space<vmem>>, %arg2: memref<8x8xf32, #tpu.memory_space<vmem>>, %arg3: memref<8x1xf32, #tpu.memory_space<vmem>>, %arg4: memref<8x3xf32, #tpu.memory_space<vmem>>, %arg5: memref<8x1xf32, #tpu.memory_space<vmem>>, %arg6: memref<8x8xf32, #tpu.memory_space<vmem>>, %arg7: memref<8x1xf32, #tpu.memory_space<vmem>>, %arg8: memref<1x128xf32, #tpu.memory_space<vmem>>, %arg9: memref<1x8x128xf32, #tpu.memory_space<vmem>>) attributes {dimension_semantics = [#tpu.dimension_semantics<parallel>], iteration_bounds = array<i64: 1>, scalar_prefetch = 0 : i64, scratch_operands = 0 : i64, tpu.core_type = #tpu.core_type<tc>, window_params = [{transform_indices = @transform_0, window_bounds = array<i64: 1, 8, 128>}, {pipeline_mode = #tpu.pipeline_mode<synchronous>, transform_indices = @transform_1, window_bounds = array<i64: 8, 8>}, {pipeline_mode = #tpu.pipeline_mode<synchronous>, transform_indices = @transform_2, window_bounds = array<i64: 8, 1>}, {pipeline_mode = #tpu.pipeline_mode<synchronous>, transform_indices = @transform_3, window_bounds = array<i64: 8, 3>}, {pipeline_mode = #tpu.pipeline_mode<synchronous>, transform_indices = @transform_4, window_bounds = array<i64: 8, 1>}, {pipeline_mode = #tpu.pipeline_mode<synchronous>, transform_indices = @transform_5, window_bounds = array<i64: 8, 8>}, {pipeline_mode = #tpu.pipeline_mode<synchronous>, transform_indices = @transform_6, window_bounds = array<i64: 8, 1>}, {pipeline_mode = #tpu.pipeline_mode<synchronous>, transform_indices = @transform_7, window_bounds = array<i64: 1, 128>}, {transform_indices = @transform_8, window_bounds = array<i64: 1, 8, 128>}]} {
    %c0 = arith.constant 0 : index
    %c0_0 = arith.constant 0 : index
    %c0_1 = arith.constant 0 : index
    %0 = vector.load %arg1[%c0, %c0_0, %c0_1] : memref<1x8x128xf32, #tpu.memory_space<vmem>>, vector<1x8x128xf32>
    %1 = vector.shape_cast %0 : vector<1x8x128xf32> to vector<8x128xf32>
    %c0_2 = arith.constant 0 : index
    %c0_3 = arith.constant 0 : index
    %2 = vector.load %arg2[%c0_2, %c0_3] : memref<8x8xf32, #tpu.memory_space<vmem>>, vector<8x8xf32>
    %3 = vector.extract_strided_slice %2 {offsets = [0, 0], sizes = [8, 1], strides = [1, 1]} : vector<8x8xf32> to vector<8x1xf32>
    %4 = vector.extract_strided_slice %1 {offsets = [0, 0], sizes = [1, 128], strides = [1, 1]} : vector<8x128xf32> to vector<1x128xf32>
    %5 = vector.broadcast %3 : vector<8x1xf32> to vector<8x128xf32>
    %6 = vector.broadcast %4 : vector<1x128xf32> to vector<8x128xf32>
    %7 = arith.mulf %5, %6 : vector<8x128xf32>
    %8 = vector.extract_strided_slice %2 {offsets = [0, 1], sizes = [8, 1], strides = [1, 1]} : vector<8x8xf32> to vector<8x1xf32>
    %9 = vector.extract_strided_slice %1 {offsets = [1, 0], sizes = [1, 128], strides = [1, 1]} : vector<8x128xf32> to vector<1x128xf32>
    %10 = vector.broadcast %8 : vector<8x1xf32> to vector<8x128xf32>
    %11 = vector.broadcast %9 : vector<1x128xf32> to vector<8x128xf32>
    %12 = arith.mulf %10, %11 : vector<8x128xf32>
    %13 = arith.addf %7, %12 : vector<8x128xf32>
    %14 = vector.extract_strided_slice %2 {offsets = [0, 2], sizes = [8, 1], strides = [1, 1]} : vector<8x8xf32> to vector<8x1xf32>
    %15 = vector.extract_strided_slice %1 {offsets = [2, 0], sizes = [1, 128], strides = [1, 1]} : vector<8x128xf32> to vector<1x128xf32>
    %16 = vector.broadcast %14 : vector<8x1xf32> to vector<8x128xf32>
    %17 = vector.broadcast %15 : vector<1x128xf32> to vector<8x128xf32>
    %18 = arith.mulf %16, %17 : vector<8x128xf32>
    %19 = arith.addf %13, %18 : vector<8x128xf32>
    %20 = vector.extract_strided_slice %2 {offsets = [0, 3], sizes = [8, 1], strides = [1, 1]} : vector<8x8xf32> to vector<8x1xf32>
    %21 = vector.extract_strided_slice %1 {offsets = [3, 0], sizes = [1, 128], strides = [1, 1]} : vector<8x128xf32> to vector<1x128xf32>
    %22 = vector.broadcast %20 : vector<8x1xf32> to vector<8x128xf32>
    %23 = vector.broadcast %21 : vector<1x128xf32> to vector<8x128xf32>
    %24 = arith.mulf %22, %23 : vector<8x128xf32>
    %25 = arith.addf %19, %24 : vector<8x128xf32>
    %c0_4 = arith.constant 0 : index
    %c0_5 = arith.constant 0 : index
    %26 = vector.load %arg3[%c0_4, %c0_5] : memref<8x1xf32, #tpu.memory_space<vmem>>, vector<8x1xf32>
    %27 = vector.broadcast %26 : vector<8x1xf32> to vector<8x128xf32>
    %28 = arith.addf %25, %27 : vector<8x128xf32>
    %cst = arith.constant 0.000000e+00 : f32
    %cst_6 = arith.constant 6.000000e+00 : f32
    %29 = vector.broadcast %cst : f32 to vector<8x128xf32>
    %30 = arith.maximumf %29, %28 : vector<8x128xf32>
    %31 = vector.broadcast %cst_6 : f32 to vector<8x128xf32>
    %32 = arith.minimumf %31, %30 : vector<8x128xf32>
    %c0_7 = arith.constant 0 : index
    %c0_8 = arith.constant 0 : index
    %33 = vector.load %arg8[%c0_7, %c0_8] : memref<1x128xf32, #tpu.memory_space<vmem>>, vector<1x128xf32>
    %34 = vector.broadcast %33 : vector<1x128xf32> to vector<8x128xf32>
    %35 = arith.mulf %32, %34 : vector<8x128xf32>
    %c0_9 = arith.constant 0 : index
    %c0_10 = arith.constant 0 : index
    %36 = vector.load %arg4[%c0_9, %c0_10] : memref<8x3xf32, #tpu.memory_space<vmem>>, vector<8x3xf32>
    %37 = vector.extract_strided_slice %36 {offsets = [0, 0], sizes = [8, 1], strides = [1, 1]} : vector<8x3xf32> to vector<8x1xf32>
    %c1_i32 = arith.constant 1 : i32
    %38 = tpu.dynamic_rotate %35 by %c1_i32 dim 1 : vector<8x128xf32>, i32 -> vector<8x128xf32>
    %39 = vector.broadcast %37 : vector<8x1xf32> to vector<8x128xf32>
    %40 = arith.mulf %39, %38 : vector<8x128xf32>
    %41 = vector.extract_strided_slice %36 {offsets = [0, 1], sizes = [8, 1], strides = [1, 1]} : vector<8x3xf32> to vector<8x1xf32>
    %42 = vector.broadcast %41 : vector<8x1xf32> to vector<8x128xf32>
    %43 = arith.mulf %42, %35 : vector<8x128xf32>
    %44 = arith.addf %40, %43 : vector<8x128xf32>
    %45 = vector.extract_strided_slice %36 {offsets = [0, 2], sizes = [8, 1], strides = [1, 1]} : vector<8x3xf32> to vector<8x1xf32>
    %c127_i32 = arith.constant 127 : i32
    %46 = tpu.dynamic_rotate %35 by %c127_i32 dim 1 : vector<8x128xf32>, i32 -> vector<8x128xf32>
    %47 = vector.broadcast %45 : vector<8x1xf32> to vector<8x128xf32>
    %48 = arith.mulf %47, %46 : vector<8x128xf32>
    %49 = arith.addf %44, %48 : vector<8x128xf32>
    %c0_11 = arith.constant 0 : index
    %c0_12 = arith.constant 0 : index
    %50 = vector.load %arg5[%c0_11, %c0_12] : memref<8x1xf32, #tpu.memory_space<vmem>>, vector<8x1xf32>
    %51 = vector.broadcast %50 : vector<8x1xf32> to vector<8x128xf32>
    %52 = arith.addf %49, %51 : vector<8x128xf32>
    %cst_13 = arith.constant 0.000000e+00 : f32
    %cst_14 = arith.constant 6.000000e+00 : f32
    %53 = vector.broadcast %cst_13 : f32 to vector<8x128xf32>
    %54 = arith.maximumf %53, %52 : vector<8x128xf32>
    %55 = vector.broadcast %cst_14 : f32 to vector<8x128xf32>
    %56 = arith.minimumf %55, %54 : vector<8x128xf32>
    %c0_15 = arith.constant 0 : index
    %c0_16 = arith.constant 0 : index
    %57 = vector.load %arg6[%c0_15, %c0_16] : memref<8x8xf32, #tpu.memory_space<vmem>>, vector<8x8xf32>
    %58 = vector.extract_strided_slice %57 {offsets = [0, 0], sizes = [8, 1], strides = [1, 1]} : vector<8x8xf32> to vector<8x1xf32>
    %59 = vector.extract_strided_slice %56 {offsets = [0, 0], sizes = [1, 128], strides = [1, 1]} : vector<8x128xf32> to vector<1x128xf32>
    %60 = vector.broadcast %58 : vector<8x1xf32> to vector<8x128xf32>
    %61 = vector.broadcast %59 : vector<1x128xf32> to vector<8x128xf32>
    %62 = arith.mulf %60, %61 : vector<8x128xf32>
    %63 = vector.extract_strided_slice %57 {offsets = [0, 1], sizes = [8, 1], strides = [1, 1]} : vector<8x8xf32> to vector<8x1xf32>
    %64 = vector.extract_strided_slice %56 {offsets = [1, 0], sizes = [1, 128], strides = [1, 1]} : vector<8x128xf32> to vector<1x128xf32>
    %65 = vector.broadcast %63 : vector<8x1xf32> to vector<8x128xf32>
    %66 = vector.broadcast %64 : vector<1x128xf32> to vector<8x128xf32>
    %67 = arith.mulf %65, %66 : vector<8x128xf32>
    %68 = arith.addf %62, %67 : vector<8x128xf32>
    %69 = vector.extract_strided_slice %57 {offsets = [0, 2], sizes = [8, 1], strides = [1, 1]} : vector<8x8xf32> to vector<8x1xf32>
    %70 = vector.extract_strided_slice %56 {offsets = [2, 0], sizes = [1, 128], strides = [1, 1]} : vector<8x128xf32> to vector<1x128xf32>
    %71 = vector.broadcast %69 : vector<8x1xf32> to vector<8x128xf32>
    %72 = vector.broadcast %70 : vector<1x128xf32> to vector<8x128xf32>
    %73 = arith.mulf %71, %72 : vector<8x128xf32>
    %74 = arith.addf %68, %73 : vector<8x128xf32>
    %75 = vector.extract_strided_slice %57 {offsets = [0, 3], sizes = [8, 1], strides = [1, 1]} : vector<8x8xf32> to vector<8x1xf32>
    %76 = vector.extract_strided_slice %56 {offsets = [3, 0], sizes = [1, 128], strides = [1, 1]} : vector<8x128xf32> to vector<1x128xf32>
    %77 = vector.broadcast %75 : vector<8x1xf32> to vector<8x128xf32>
    %78 = vector.broadcast %76 : vector<1x128xf32> to vector<8x128xf32>
    %79 = arith.mulf %77, %78 : vector<8x128xf32>
    %80 = arith.addf %74, %79 : vector<8x128xf32>
    %81 = vector.extract_strided_slice %57 {offsets = [0, 4], sizes = [8, 1], strides = [1, 1]} : vector<8x8xf32> to vector<8x1xf32>
    %82 = vector.extract_strided_slice %56 {offsets = [4, 0], sizes = [1, 128], strides = [1, 1]} : vector<8x128xf32> to vector<1x128xf32>
    %83 = vector.broadcast %81 : vector<8x1xf32> to vector<8x128xf32>
    %84 = vector.broadcast %82 : vector<1x128xf32> to vector<8x128xf32>
    %85 = arith.mulf %83, %84 : vector<8x128xf32>
    %86 = arith.addf %80, %85 : vector<8x128xf32>
    %87 = vector.extract_strided_slice %57 {offsets = [0, 5], sizes = [8, 1], strides = [1, 1]} : vector<8x8xf32> to vector<8x1xf32>
    %88 = vector.extract_strided_slice %56 {offsets = [5, 0], sizes = [1, 128], strides = [1, 1]} : vector<8x128xf32> to vector<1x128xf32>
    %89 = vector.broadcast %87 : vector<8x1xf32> to vector<8x128xf32>
    %90 = vector.broadcast %88 : vector<1x128xf32> to vector<8x128xf32>
    %91 = arith.mulf %89, %90 : vector<8x128xf32>
    %92 = arith.addf %86, %91 : vector<8x128xf32>
    %93 = vector.extract_strided_slice %57 {offsets = [0, 6], sizes = [8, 1], strides = [1, 1]} : vector<8x8xf32> to vector<8x1xf32>
    %94 = vector.extract_strided_slice %56 {offsets = [6, 0], sizes = [1, 128], strides = [1, 1]} : vector<8x128xf32> to vector<1x128xf32>
    %95 = vector.broadcast %93 : vector<8x1xf32> to vector<8x128xf32>
    %96 = vector.broadcast %94 : vector<1x128xf32> to vector<8x128xf32>
    %97 = arith.mulf %95, %96 : vector<8x128xf32>
    %98 = arith.addf %92, %97 : vector<8x128xf32>
    %99 = vector.extract_strided_slice %57 {offsets = [0, 7], sizes = [8, 1], strides = [1, 1]} : vector<8x8xf32> to vector<8x1xf32>
    %100 = vector.extract_strided_slice %56 {offsets = [7, 0], sizes = [1, 128], strides = [1, 1]} : vector<8x128xf32> to vector<1x128xf32>
    %101 = vector.broadcast %99 : vector<8x1xf32> to vector<8x128xf32>
    %102 = vector.broadcast %100 : vector<1x128xf32> to vector<8x128xf32>
    %103 = arith.mulf %101, %102 : vector<8x128xf32>
    %104 = arith.addf %98, %103 : vector<8x128xf32>
    %c0_17 = arith.constant 0 : index
    %c0_18 = arith.constant 0 : index
    %105 = vector.load %arg7[%c0_17, %c0_18] : memref<8x1xf32, #tpu.memory_space<vmem>>, vector<8x1xf32>
    %106 = vector.broadcast %105 : vector<8x1xf32> to vector<8x128xf32>
    %107 = arith.addf %104, %106 : vector<8x128xf32>
    %108 = arith.addf %107, %1 : vector<8x128xf32>
    %c0_19 = arith.constant 0 : index
    %c0_20 = arith.constant 0 : index
    %c0_21 = arith.constant 0 : index
    %109 = vector.load %arg9[%c0_19, %c0_20, %c0_21] : memref<1x8x128xf32, #tpu.memory_space<vmem>>, vector<1x8x128xf32>
    %110 = vector.shape_cast %109 : vector<1x8x128xf32> to vector<8x128xf32>
    %111 = vector.shape_cast %108 : vector<8x128xf32> to vector<1x8x128xf32>
    tpu.vector_store %arg9[%c0_19, %c0_20, %c0_21], %111 {strides = array<i32>} : memref<1x8x128xf32, #tpu.memory_space<vmem>>, vector<1x8x128xf32>,
    return
  }
  func.func @transform_0(%arg0: i32) -> (i32, i32, i32) {
    %c0_i32 = arith.constant 0 : i32
    %c0_i32_0 = arith.constant 0 : i32
    %c0_i32_1 = arith.constant 0 : i32
    return %arg0, %c0_i32, %c0_i32_0 : i32, i32, i32
  }
  func.func @transform_1(%arg0: i32) -> (i32, i32) {
    %c0_i32 = arith.constant 0 : i32
    %c0_i32_0 = arith.constant 0 : i32
    %c0_i32_1 = arith.constant 0 : i32
    return %c0_i32, %c0_i32_0 : i32, i32
  }
  func.func @transform_2(%arg0: i32) -> (i32, i32) {
    %c0_i32 = arith.constant 0 : i32
    %c0_i32_0 = arith.constant 0 : i32
    %c0_i32_1 = arith.constant 0 : i32
    return %c0_i32, %c0_i32_0 : i32, i32
  }
  func.func @transform_3(%arg0: i32) -> (i32, i32) {
    %c0_i32 = arith.constant 0 : i32
    %c0_i32_0 = arith.constant 0 : i32
    %c0_i32_1 = arith.constant 0 : i32
    return %c0_i32, %c0_i32_0 : i32, i32
  }
  func.func @transform_4(%arg0: i32) -> (i32, i32) {
    %c0_i32 = arith.constant 0 : i32
    %c0_i32_0 = arith.constant 0 : i32
    %c0_i32_1 = arith.constant 0 : i32
    return %c0_i32, %c0_i32_0 : i32, i32
  }
  func.func @transform_5(%arg0: i32) -> (i32, i32) {
    %c0_i32 = arith.constant 0 : i32
    %c0_i32_0 = arith.constant 0 : i32
    %c0_i32_1 = arith.constant 0 : i32
    return %c0_i32, %c0_i32_0 : i32, i32
  }
  func.func @transform_6(%arg0: i32) -> (i32, i32) {
    %c0_i32 = arith.constant 0 : i32
    %c0_i32_0 = arith.constant 0 : i32
    %c0_i32_1 = arith.constant 0 : i32
    return %c0_i32, %c0_i32_0 : i32, i32
  }
  func.func @transform_7(%arg0: i32) -> (i32, i32) {
    %c0_i32 = arith.constant 0 : i32
    %c0_i32_0 = arith.constant 0 : i32
    %c0_i32_1 = arith.constant 0 : i32
    return %c0_i32, %c0_i32_0 : i32, i32
  }
  func.func @transform_8(%arg0: i32) -> (i32, i32, i32) {
    %c0_i32 = arith.constant 0 : i32
    %c0_i32_0 = arith.constant 0 : i32
    %c0_i32_1 = arith.constant 0 : i32
    return %arg0, %c0_i32, %c0_i32_0 : i32, i32, i32
  }
}

</mosaic_0001>

<llo_original>
// kernel: tpu_custom_call.1
$region0: #{tpu_custom_call.1}
  #allocation0 [shape = 'u32[]', space=smem, size = 0x4, offset = 0x4, fixed_abs, tag = 'smem constant byte address 0x4 - core index']
  #allocation1 [shape = 'u32[72,128]{1,0:T(1,128)}', space=vmem, size = 0x9000, scoped, tag = 'internal scratch']
  %s0 = inlined_call_operand.vmem [shape: f32[1,8,128], index: 0, kind: input, shape index: {}]
  %s1 = inlined_call_operand.vmem [shape: f32[8,8], index: 1, kind: input, shape index: {}]
  %s2 = inlined_call_operand.vmem [shape: f32[8,1], index: 2, kind: input, shape index: {}]
  %s3 = inlined_call_operand.vmem [shape: f32[8,3], index: 3, kind: input, shape index: {}]
  %s4 = inlined_call_operand.vmem [shape: f32[8,1], index: 4, kind: input, shape index: {}]
  %s5 = inlined_call_operand.vmem [shape: f32[8,8], index: 5, kind: input, shape index: {}]
  %s6 = inlined_call_operand.vmem [shape: f32[8,1], index: 6, kind: input, shape index: {}]
  %s7 = inlined_call_operand.vmem [shape: f32[1,128], index: 7, kind: input, shape index: {}]
  %s8 = inlined_call_operand.hbm [shape: f32[1,8,128], index: 8, kind: output, shape index: {}]
  %s9 = sld [smem:[#allocation0]]
  $region42: #{tpu_custom_call.1} parent=0
    _
  %s11 = ssub.s32 1, %s9
  %s12 = scalar_select 0, %s11, %s9
  $region1: #{tpu_custom_call.1} parent=0
    #allocation2 [shape = 'u8[4096]{0}', space=vmem, size = 0x1000, scoped, tag = 'output window, operand 0, single buffered']
    #allocation3 [shape = 's32[1]{0}', space=sflag, size = 0x4, scoped, tag = 'scoped memory for tpu_custom_call.1']
    %13 = vsyncpa [#allocation3], 0
    // Predicated region
    $region2: #{tpu_custom_call.1} parent=1 // pred_check
      _
    $region3: #{tpu_custom_call.1} parent=1 // pred_check_branch
      %15 = sbr.rel (0) target = $region5
    $region4: #{tpu_custom_call.1} parent=1 // pred_region
      _
    $region5: #{tpu_custom_call.1} parent=1 // pred_fallthru
      _
    // Predicated region
    $region6: #{tpu_custom_call.1} parent=1 // pred_check
      _
    $region7: #{tpu_custom_call.1} parent=1 // pred_check_branch
      %17 = sbr.rel (0) target = $region9
    $region8: #{tpu_custom_call.1} parent=1 // pred_region
      _
    $region9: #{tpu_custom_call.1} parent=1 // pred_fallthru
      _
    // Predicated region
    $region10: #{tpu_custom_call.1} parent=1 // pred_check
      _
    $region11: #{tpu_custom_call.1} parent=1 // pred_check_branch
      %19 = sbr.rel (0) target = $region13
    $region12: #{tpu_custom_call.1} parent=1 // pred_region
      _
    $region13: #{tpu_custom_call.1} parent=1 // pred_fallthru
      _
    // Predicated region
    $region14: #{tpu_custom_call.1} parent=1 // pred_check
      _
    $region15: #{tpu_custom_call.1} parent=1 // pred_check_branch
      %21 = sbr.rel (0) target = $region17
    $region16: #{tpu_custom_call.1} parent=1 // pred_region
      _
    $region17: #{tpu_custom_call.1} parent=1 // pred_fallthru
      _
    // Predicated region
    $region18: #{tpu_custom_call.1} parent=1 // pred_check
      _
    $region19: #{tpu_custom_call.1} parent=1 // pred_check_branch
      %23 = sbr.rel (0) target = $region21
    $region20: #{tpu_custom_call.1} parent=1 // pred_region
      _
    $region21: #{tpu_custom_call.1} parent=1 // pred_fallthru
      _
    // Predicated region
    $region22: #{tpu_custom_call.1} parent=1 // pred_check
      _
    $region23: #{tpu_custom_call.1} parent=1 // pred_check_branch
      %25 = sbr.rel (0) target = $region25
    $region24: #{tpu_custom_call.1} parent=1 // pred_region
      _
    $region25: #{tpu_custom_call.1} parent=1 // pred_fallthru
      _
    // Predicated region
    $region26: #{tpu_custom_call.1} parent=1 // pred_check
      _
    $region27: #{tpu_custom_call.1} parent=1 // pred_check_branch
      %27 = sbr.rel (0) target = $region29
    $region28: #{tpu_custom_call.1} parent=1 // pred_region
      _
    $region29: #{tpu_custom_call.1} parent=1 // pred_fallthru
      _
    // Predicated region
    $region30: #{tpu_custom_call.1} parent=1 // pred_check
      _
    $region31: #{tpu_custom_call.1} parent=1 // pred_check_branch
      %29 = sbr.rel (0) target = $region33
    $region32: #{tpu_custom_call.1} parent=1 // pred_region
      _
    $region33: #{tpu_custom_call.1} parent=1 // pred_fallthru
      _
    %v30 = vld [vmem:[%s0] sm:$0xff]
    %v31 = vld [vmem:[%s1] sm:$0xff]
    %33 = vset.pattern.permute.xlu0 0
    %34 = vperm.xlu0 %33, %v31
    %v35 = vpop.permute.xlu0 %34
    %v37 = vperm.slane %v30, 0
    %v38 = vmul.f32 %v35, %v37
    %39 = vset.pattern.permute.xlu0 1
    %40 = vperm.xlu0 %39, %v31
    %v41 = vpop.permute.xlu0 %40
    %v43 = vperm.slane %v30, 1
    %v44 = vmul.f32 %v41, %v43
    %v45 = vadd.f32 %v38, %v44
    %46 = vset.pattern.permute.xlu0 2
    %47 = vperm.xlu0 %46, %v31
    %v48 = vpop.permute.xlu0 %47
    %v50 = vperm.slane %v30, 2
    %v51 = vmul.f32 %v48, %v50
    %v52 = vadd.f32 %v45, %v51
    %53 = vset.pattern.permute.xlu0 3
    %54 = vperm.xlu0 %53, %v31
    %v55 = vpop.permute.xlu0 %54
    %v57 = vperm.slane %v30, 3
    %v58 = vmul.f32 %v55, %v57
    %v59 = vadd.f32 %v52, %v58
    %v60 = vld [vmem:[%s2] sm:$0xff]
    %62 = vset.pattern.permute.xlu0 0
    %63 = vperm.xlu0 %62, %v60
    %v64 = vpop.permute.xlu0 %63
    %v66 = vadd.f32 %v59, %v64
    %v67 = vmax.f32 %v66, 0.0
    %v68 = vmin.f32 %v67, 6.0
    %v69 = vld [vmem:[%s7] sm:$0x1]
    %v71 = vperm.slane %v69, 0
    %v73 = vmul.f32 %v68, %v71
    %v74 = vld [vmem:[%s3] sm:$0xff]
    %75 = vrot.lane.b32.xlu0 %v73, 1
    %v76 = vpop.permute.xlu0 %75
    %78 = vset.pattern.permute.xlu0 0
    %79 = vperm.xlu0 %78, %v74
    %v80 = vpop.permute.xlu0 %79
    %v82 = vmul.f32 %v80, %v76
    %83 = vset.pattern.permute.xlu0 1
    %84 = vperm.xlu0 %83, %v74
    %v85 = vpop.permute.xlu0 %84
    %v87 = vmul.f32 %v85, %v73
    %v88 = vadd.f32 %v82, %v87
    %89 = vrot.lane.b32.xlu0 %v73, 127
    %v90 = vpop.permute.xlu0 %89
    %91 = vset.pattern.permute.xlu0 2
    %92 = vperm.xlu0 %91, %v74
    %v93 = vpop.permute.xlu0 %92
    %v95 = vmul.f32 %v93, %v90
    %v96 = vadd.f32 %v88, %v95
    %v97 = vld [vmem:[%s4] sm:$0xff]
    %99 = vset.pattern.permute.xlu0 0
    %100 = vperm.xlu0 %99, %v97
    %v101 = vpop.permute.xlu0 %100
    %v103 = vadd.f32 %v96, %v101
    %v104 = vmax.f32 %v103, 0.0
    %v105 = vmin.f32 %v104, 6.0
    %v106 = vld [vmem:[%s5] sm:$0xff]
    %108 = vset.pattern.permute.xlu0 0
    %109 = vperm.xlu0 %108, %v106
    %v110 = vpop.permute.xlu0 %109
    %v112 = vperm.slane %v105, 0
    %v113 = vmul.f32 %v110, %v112
    %114 = vset.pattern.permute.xlu0 1
    %115 = vperm.xlu0 %114, %v106
    %v116 = vpop.permute.xlu0 %115
    %v118 = vperm.slane %v105, 1
    %v119 = vmul.f32 %v116, %v118
    %v120 = vadd.f32 %v113, %v119
    %121 = vset.pattern.permute.xlu0 2
    %122 = vperm.xlu0 %121, %v106
    %v123 = vpop.permute.xlu0 %122
    %v125 = vperm.slane %v105, 2
    %v126 = vmul.f32 %v123, %v125
    %v127 = vadd.f32 %v120, %v126
    %128 = vset.pattern.permute.xlu0 3
    %129 = vperm.xlu0 %128, %v106
    %v130 = vpop.permute.xlu0 %129
    %v132 = vperm.slane %v105, 3
    %v133 = vmul.f32 %v130, %v132
    %v134 = vadd.f32 %v127, %v133
    %135 = vset.pattern.permute.xlu0 4
    %136 = vperm.xlu0 %135, %v106
    %v137 = vpop.permute.xlu0 %136
    %v139 = vperm.slane %v105, 4
    %v140 = vmul.f32 %v137, %v139
    %v141 = vadd.f32 %v134, %v140
    %142 = vset.pattern.permute.xlu0 5
    %143 = vperm.xlu0 %142, %v106
    %v144 = vpop.permute.xlu0 %143
    %v146 = vperm.slane %v105, 5
    %v147 = vmul.f32 %v144, %v146
    %v148 = vadd.f32 %v141, %v147
    %149 = vset.pattern.permute.xlu0 6
    %150 = vperm.xlu0 %149, %v106
    %v151 = vpop.permute.xlu0 %150
    %v153 = vperm.slane %v105, 6
    %v154 = vmul.f32 %v151, %v153
    %v155 = vadd.f32 %v148, %v154
    %156 = vset.pattern.permute.xlu0 7
    %157 = vperm.xlu0 %156, %v106
    %v158 = vpop.permute.xlu0 %157
    %v160 = vperm.slane %v105, 7
    %v161 = vmul.f32 %v158, %v160
    %v162 = vadd.f32 %v155, %v161
    %v163 = vld [vmem:[%s6] sm:$0xff]
    %165 = vset.pattern.permute.xlu0 0
    %166 = vperm.xlu0 %165, %v163
    %v167 = vpop.permute.xlu0 %166
    %v169 = vadd.f32 %v162, %v167
    %v170 = vadd.f32 %v169, %v30
    %171 = vst [vmem:[#allocation2] sm:$0xff] %v170
    // Predicated region
    $region34: #{tpu_custom_call.1} parent=1 // pred_check
      _
    $region35: #{tpu_custom_call.1} parent=1 // pred_check_branch
      %173 = sbr.rel (0) target = $region37
    $region36: #{tpu_custom_call.1} parent=1 // pred_region
      %175 = vsyncadd [#allocation3], 0
      %s177 = sshll.u32 [#allocation2], 4
      %s178 = int_to_ptr.vmem [resolvable:$true] %s177
      %s179 = sshll.u32 %s8, 4
      %s180 = int_to_ptr.hbm [resolvable:$true] %s179
      %182 = dma.vmem_to_hbm [thread:$0]  %s178, 128, %s180, [#allocation3]
    $region37: #{tpu_custom_call.1} parent=1 // pred_fallthru
      _
    // Predicated region
    $region38: #{tpu_custom_call.1} parent=1 // pred_check
      _
    $region39: #{tpu_custom_call.1} parent=1 // pred_check_branch
      %184 = sbr.rel (0) target = $region41
    $region40: #{tpu_custom_call.1} parent=1 // pred_region
      %186 = dma.done [#allocation3], 128
    $region41: #{tpu_custom_call.1} parent=1 // pred_fallthru
      _
    %187 = vsyncpa [#allocation3], 1

// kernel: tpu_custom_call.1
$region0: #{tpu_custom_call.1}
  #allocation0 [shape = 'u32[]', space=smem, size = 0x4, offset = 0x4, fixed_abs, tag = 'smem constant byte address 0x4 - core index']
  #allocation1 [shape = 'u32[72,128]{1,0:T(1,128)}', space=vmem, size = 0x9000, scoped, tag = 'internal scratch']
  %s0 = inlined_call_operand.vmem [shape: f32[1,8,128], index: 0, kind: input, shape index: {}]
  %s1 = inlined_call_operand.vmem [shape: f32[8,8], index: 1, kind: input, shape index: {}]
  %s2 = inlined_call_operand.vmem [shape: f32[8,1], index: 2, kind: input, shape index: {}]
  %s3 = inlined_call_operand.vmem [shape: f32[8,3], index: 3, kind: input, shape index: {}]
  %s4 = inlined_call_operand.vmem [shape: f32[8,1], index: 4, kind: input, shape index: {}]
  %s5 = inlined_call_operand.vmem [shape: f32[8,8], index: 5, kind: input, shape index: {}]
  %s6 = inlined_call_operand.vmem [shape: f32[8,1], index: 6, kind: input, shape index: {}]
  %s7 = inlined_call_operand.vmem [shape: f32[1,128], index: 7, kind: input, shape index: {}]
  %s8 = inlined_call_operand.hbm [shape: f32[1,8,128], index: 8, kind: output, shape index: {}]
  %s9 = sld [smem:[#allocation0]]
  $region42: #{tpu_custom_call.1} parent=0
    _
  %s11 = ssub.s32 1, %s9
  %s12 = scalar_select 0, %s11, %s9
  $region1: #{tpu_custom_call.1} parent=0
    #allocation2 [shape = 'u8[4096]{0}', space=vmem, size = 0x1000, scoped, tag = 'output window, operand 0, single buffered']
    #allocation3 [shape = 's32[1]{0}', space=sflag, size = 0x4, scoped, tag = 'scoped memory for tpu_custom_call.1']
    %13 = vsyncpa [#allocation3], 0
    // Predicated region
    $region2: #{tpu_custom_call.1} parent=1 // pred_check
      _
    $region3: #{tpu_custom_call.1} parent=1 // pred_check_branch
      %15 = sbr.rel (0) target = $region5
    $region4: #{tpu_custom_call.1} parent=1 // pred_region
      _
    $region5: #{tpu_custom_call.1} parent=1 // pred_fallthru
      _
    // Predicated region
    $region6: #{tpu_custom_call.1} parent=1 // pred_check
      _
    $region7: #{tpu_custom_call.1} parent=1 // pred_check_branch
      %17 = sbr.rel (0) target = $region9
    $region8: #{tpu_custom_call.1} parent=1 // pred_region
      _
    $region9: #{tpu_custom_call.1} parent=1 // pred_fallthru
      _
    // Predicated region
    $region10: #{tpu_custom_call.1} parent=1 // pred_check
      _
    $region11: #{tpu_custom_call.1} parent=1 // pred_check_branch
      %19 = sbr.rel (0) target = $region13
    $region12: #{tpu_custom_call.1} parent=1 // pred_region
      _
    $region13: #{tpu_custom_call.1} parent=1 // pred_fallthru
      _
    // Predicated region
    $region14: #{tpu_custom_call.1} parent=1 // pred_check
      _
    $region15: #{tpu_custom_call.1} parent=1 // pred_check_branch
      %21 = sbr.rel (0) target = $region17
    $region16: #{tpu_custom_call.1} parent=1 // pred_region
      _
    $region17: #{tpu_custom_call.1} parent=1 // pred_fallthru
      _
    // Predicated region
    $region18: #{tpu_custom_call.1} parent=1 // pred_check
      _
    $region19: #{tpu_custom_call.1} parent=1 // pred_check_branch
      %23 = sbr.rel (0) target = $region21
    $region20: #{tpu_custom_call.1} parent=1 // pred_region
      _
    $region21: #{tpu_custom_call.1} parent=1 // pred_fallthru
      _
    // Predicated region
    $region22: #{tpu_custom_call.1} parent=1 // pred_check
      _
    $region23: #{tpu_custom_call.1} parent=1 // pred_check_branch
      %25 = sbr.rel (0) target = $region25
    $region24: #{tpu_custom_call.1} parent=1 // pred_region
      _
    $region25: #{tpu_custom_call.1} parent=1 // pred_fallthru
      _
    // Predicated region
    $region26: #{tpu_custom_call.1} parent=1 // pred_check
      _
    $region27: #{tpu_custom_call.1} parent=1 // pred_check_branch
      %27 = sbr.rel (0) target = $region29
    $region28: #{tpu_custom_call.1} parent=1 // pred_region
      _
    $region29: #{tpu_custom_call.1} parent=1 // pred_fallthru
      _
    // Predicated region
    $region30: #{tpu_custom_call.1} parent=1 // pred_check
      _
    $region31: #{tpu_custom_call.1} parent=1 // pred_check_branch
      %29 = sbr.rel (0) target = $region33
    $region32: #{tpu_custom_call.1} parent=1 // pred_region
      _
    $region33: #{tpu_custom_call.1} parent=1 // pred_fallthru
      _
    %v30 = vld [vmem:[%s0] sm:$0xff]
    %v31 = vld [vmem:[%s1] sm:$0xff]
    %33 = vset.pattern.permute.xlu0 0
    %34 = vperm.xlu0 %33, %v31
    %v35 = vpop.permute.xlu0 %34
    %v37 = vperm.slane %v30, 0
    %v38 = vmul.f32 %v35, %v37
    %39 = vset.pattern.permute.xlu0 1
    %40 = vperm.xlu0 %39, %v31
    %v41 = vpop.permute.xlu0 %40
    %v43 = vperm.slane %v30, 1
    %v44 = vmul.f32 %v41, %v43
    %v45 = vadd.f32 %v38, %v44
    %46 = vset.pattern.permute.xlu0 2
    %47 = vperm.xlu0 %46, %v31
    %v48 = vpop.permute.xlu0 %47
    %v50 = vperm.slane %v30, 2
    %v51 = vmul.f32 %v48, %v50
    %v52 = vadd.f32 %v45, %v51
    %53 = vset.pattern.permute.xlu0 3
    %54 = vperm.xlu0 %53, %v31
    %v55 = vpop.permute.xlu0 %54
    %v57 = vperm.slane %v30, 3
    %v58 = vmul.f32 %v55, %v57
    %v59 = vadd.f32 %v52, %v58
    %v60 = vld [vmem:[%s2] sm:$0xff]
    %62 = vset.pattern.permute.xlu0 0
    %63 = vperm.xlu0 %62, %v60
    %v64 = vpop.permute.xlu0 %63
    %v66 = vadd.f32 %v59, %v64
    %v67 = vmax.f32 %v66, 0.0
    %v68 = vmin.f32 %v67, 6.0
    %v69 = vld [vmem:[%s7] sm:$0x1]
    %v71 = vperm.slane %v69, 0
    %v73 = vmul.f32 %v68, %v71
    %v74 = vld [vmem:[%s3] sm:$0xff]
    %75 = vrot.lane.b32.xlu0 %v73, 1
    %v76 = vpop.permute.xlu0 %75
    %78 = vset.pattern.permute.xlu0 0
    %79 = vperm.xlu0 %78, %v74
    %v80 = vpop.permute.xlu0 %79
    %v82 = vmul.f32 %v80, %v76
    %83 = vset.pattern.permute.xlu0 1
    %84 = vperm.xlu0 %83, %v74
    %v85 = vpop.permute.xlu0 %84
    %v87 = vmul.f32 %v85, %v73
    %v88 = vadd.f32 %v82, %v87
    %89 = vrot.lane.b32.xlu0 %v73, 127
    %v90 = vpop.permute.xlu0 %89
    %91 = vset.pattern.permute.xlu0 2
    %92 = vperm.xlu0 %91, %v74
    %v93 = vpop.permute.xlu0 %92
    %v95 = vmul.f32 %v93, %v90
    %v96 = vadd.f32 %v88, %v95
    %v97 = vld [vmem:[%s4] sm:$0xff]
    %99 = vset.pattern.permute.xlu0 0
    %100 = vperm.xlu0 %99, %v97
    %v101 = vpop.permute.xlu0 %100
    %v103 = vadd.f32 %v96, %v101
    %v104 = vmax.f32 %v103, 0.0
    %v105 = vmin.f32 %v104, 6.0
    %v106 = vld [vmem:[%s5] sm:$0xff]
    %108 = vset.pattern.permute.xlu0 0
    %109 = vperm.xlu0 %108, %v106
    %v110 = vpop.permute.xlu0 %109
    %v112 = vperm.slane %v105, 0
    %v113 = vmul.f32 %v110, %v112
    %114 = vset.pattern.permute.xlu0 1
    %115 = vperm.xlu0 %114, %v106
    %v116 = vpop.permute.xlu0 %115
    %v118 = vperm.slane %v105, 1
    %v119 = vmul.f32 %v116, %v118
    %v120 = vadd.f32 %v113, %v119
    %121 = vset.pattern.permute.xlu0 2
    %122 = vperm.xlu0 %121, %v106
    %v123 = vpop.permute.xlu0 %122
    %v125 = vperm.slane %v105, 2
    %v126 = vmul.f32 %v123, %v125
    %v127 = vadd.f32 %v120, %v126
    %128 = vset.pattern.permute.xlu0 3
    %129 = vperm.xlu0 %128, %v106
    %v130 = vpop.permute.xlu0 %129
    %v132 = vperm.slane %v105, 3
    %v133 = vmul.f32 %v130, %v132
    %v134 = vadd.f32 %v127, %v133
    %135 = vset.pattern.permute.xlu0 4
    %136 = vperm.xlu0 %135, %v106
    %v137 = vpop.permute.xlu0 %136
    %v139 = vperm.slane %v105, 4
    %v140 = vmul.f32 %v137, %v139
    %v141 = vadd.f32 %v134, %v140
    %142 = vset.pattern.permute.xlu0 5
    %143 = vperm.xlu0 %142, %v106
    %v144 = vpop.permute.xlu0 %143
    %v146 = vperm.slane %v105, 5
    %v147 = vmul.f32 %v144, %v146
    %v148 = vadd.f32 %v141, %v147
    %149 = vset.pattern.permute.xlu0 6
    %150 = vperm.xlu0 %149, %v106
    %v151 = vpop.permute.xlu0 %150
    %v153 = vperm.slane %v105, 6
    %v154 = vmul.f32 %v151, %v153
    %v155 = vadd.f32 %v148, %v154
    %156 = vset.pattern.permute.xlu0 7
    %157 = vperm.xlu0 %156, %v106
    %v158 = vpop.permute.xlu0 %157
    %v160 = vperm.slane %v105, 7
    %v161 = vmul.f32 %v158, %v160
    %v162 = vadd.f32 %v155, %v161
    %v163 = vld [vmem:[%s6] sm:$0xff]
    %165 = vset.pattern.permute.xlu0 0
    %166 = vperm.xlu0 %165, %v163
    %v167 = vpop.permute.xlu0 %166
    %v169 = vadd.f32 %v162, %v167
    %v170 = vadd.f32 %v169, %v30
    %171 = vst [vmem:[#allocation2] sm:$0xff] %v170
    // Predicated region
    $region34: #{tpu_custom_call.1} parent=1 // pred_check
      _
    $region35: #{tpu_custom_call.1} parent=1 // pred_check_branch
      %173 = sbr.rel (0) target = $region37
    $region36: #{tpu_custom_call.1} parent=1 // pred_region
      %175 = vsyncadd [#allocation3], 0
      %s177 = sshll.u32 [#allocation2], 4
      %s178 = int_to_ptr.vmem [resolvable:$true] %s177
      %s179 = sshll.u32 %s8, 4
      %s180 = int_to_ptr.hbm [resolvable:$true] %s179
      %182 = dma.vmem_to_hbm [thread:$0]  %s178, 128, %s180, [#allocation3]
    $region37: #{tpu_custom_call.1} parent=1 // pred_fallthru
      _
    // Predicated region
    $region38: #{tpu_custom_call.1} parent=1 // pred_check
      _
    $region39: #{tpu_custom_call.1} parent=1 // pred_check_branch
      %184 = sbr.rel (0) target = $region41
    $region40: #{tpu_custom_call.1} parent=1 // pred_region
      %186 = dma.done [#allocation3], 128
    $region41: #{tpu_custom_call.1} parent=1 // pred_fallthru
      _
    %187 = vsyncpa [#allocation3], 1

</llo_original>
